<compile_context>
chip_gen: v7x
topology: tpu7x:2x2x1
jax: 0.10.0
libtpu: 0.0.40
codegen_flags: <defaults>
</compile_context>

<pallas_src>
import math

import jax
import jax.numpy as jnp
from jax import lax
from jax.experimental import pallas as pl
from jax.experimental.pallas import tpu as pltpu

NUM_BITS = 8
QMAX = 2.0 ** NUM_BITS - 1.0  # 255.0 (unsigned 8-bit)


def _round_up(a, b):
    return ((a + b - 1) // b) * b


def _pick_tile(padded_dim, candidates):
    for c in candidates:
        if padded_dim % c == 0:
            return c
    return padded_dim


def _vmem_budget_bytes():
    """Scoped-VMEM budget: ~48 MiB on v7x (64 MiB/TC), ~96 MiB on v5e/v6e (128 MiB)."""
    try:
        cap = int(getattr(pltpu.get_tpu_info(), "vmem_capacity_bytes", 64 << 20))
    except Exception:
        cap = 64 << 20
    return max(16 << 20, min((cap * 3) // 4, 96 << 20))


# --------------------------- quant parameter glue ---------------------------

def _scale_zp_from_minmax(rmin, rmax):
    rmax = jnp.maximum(rmax.astype(jnp.float32), 0.0)
    rmin = jnp.minimum(rmin.astype(jnp.float32), 0.0)
    # NOTE: epsilon floor is a deliberate deviation from the PyTorch reference,
    # which would produce inf/NaN for an all-zero tensor (scale == 0).
    scale = jnp.maximum((rmax - rmin) / QMAX, jnp.float32(1e-9))
    zp = jnp.round(jnp.clip(QMAX - rmax / scale, 0.0, QMAX))
    return scale, zp


def qparam_scale_zp(t):
    return _scale_zp_from_minmax(jnp.min(t), jnp.max(t))


# --------------- fake-quantize + pad + cast prepass (x and W.T) --------------

def _make_fq_pad_cast_kernel(tr, tc, rows_valid, cols_valid, mask_rows, mask_cols):
    def kernel(sz_ref, x_ref, o_ref):
        inv_s, s, zp = sz_ref[0], sz_ref[1], sz_ref[2]
        x = x_ref[...]
        q = jnp.round(jnp.clip(x * inv_s + zp, 0.0, QMAX))
        y = s * (q - zp)
        if mask_rows or mask_cols:
            ok = None
            if mask_rows:
                rows = lax.broadcasted_iota(jnp.int32, y.shape, 0)
                ok = rows < (rows_valid - pl.program_id(0) * tr)
            if mask_cols:
                cols = lax.broadcasted_iota(jnp.int32, y.shape, 1)
                okc = cols < (cols_valid - pl.program_id(1) * tc)
                ok = okc if ok is None else jnp.logical_and(ok, okc)
            y = jnp.where(ok, y, 0.0)          # padded region is explicit zeros
        o_ref[...] = y.astype(o_ref.dtype)

    return kernel


def fq_pad_cast(x2d, scale, zp, rows_padded, cols_padded, row_tile, *,
                out_dtype=jnp.bfloat16, budget=None):
    """FakeQuantize + zero-pad to (rows_padded, cols_padded) + cast, one pass.

    Padding is done inside the kernel (no separate XLA pad copy of the input);
    padded rows/cols are zeros, so they are inert in the downstream GEMM.
    """
    R, C = x2d.shape
    budget = budget if budget is not None else _vmem_budget_bytes()
    tr = row_tile                                   # caller guarantees tr | rows_padded
    tc = _pick_tile(cols_padded, (512, 256, 128))
    gr, gc = rows_padded // tr, cols_padded // tc
    mask_rows = (rows_padded != R)
    mask_cols = (cols_padded != C)
    sz = jnp.stack([1.0 / scale, scale, zp]).astype(jnp.float32)
    kernel = _make_fq_pad_cast_kernel(tr, tc, R, C, mask_rows, mask_cols)
    return pl.pallas_call(
        kernel,
        out_shape=jax.ShapeDtypeStruct((rows_padded, cols_padded), out_dtype),
        grid=(gr, gc),
        in_specs=[
            pl.BlockSpec(memory_space=pltpu.MemorySpace.SMEM),   # [1/s, s, zp]
            pl.BlockSpec((tr, tc), lambda i, j: (i, j)),
        ],
        out_specs=pl.BlockSpec((tr, tc), lambda i, j: (i, j)),
        compiler_params=pltpu.CompilerParams(
            dimension_semantics=("parallel", "parallel"),
            vmem_limit_bytes=int(min(max(4 * tr * tc * 6, 32 << 20), budget)),
        ),
    )(sz, x2d.astype(jnp.float32))


# ------------------- final fq(y, qo) writing unpadded output -----------------

def _make_fq_out_kernel(out_cols, in_cols):
    slice_cols = (out_cols != in_cols)

    def kernel(sz_ref, y_ref, o_ref):
        inv_s, s, zp = sz_ref[0], sz_ref[1], sz_ref[2]
        y = y_ref[...]
        q = jnp.round(jnp.clip(y * inv_s + zp, 0.0, QMAX))
        out = s * (q - zp)
        if slice_cols:
            out = out[:, :out_cols]
        o_ref[...] = out.astype(o_ref.dtype)

    return kernel


def fake_quantize_output(y_p, scale, zp, M, Nf, *, budget=None):
    """fq(y, qo) that writes the unpadded (M, Nf) result directly (no slice copy)."""
    Mp, Np = y_p.shape
    budget = budget if budget is not None else _vmem_budget_bytes()
    if Nf % 128 == 0:                              # fully lane-tiled path (Np == Nf)
        tc_in = tc_out = _pick_tile(Nf, (512, 256, 128))
        gc = Nf // tc_out
    else:                                          # ragged N: full rows at once
        tc_in, tc_out, gc = Np, Nf, 1
    tr = 8
    for t in (1024, 512, 256, 128, 64, 32, 16, 8):  # cdiv grid: no divisibility need
        if 2 * t * (tc_in + tc_out) * 4 <= min(budget // 2, 24 << 20):
            tr = t
            break
    tr = min(tr, _round_up(M, 8))
    gr = pl.cdiv(M, tr)
    sz = jnp.stack([1.0 / scale, scale, zp]).astype(jnp.float32)
    kernel = _make_fq_out_kernel(tc_out, tc_in)
    return pl.pallas_call(
        kernel,
        out_shape=jax.ShapeDtypeStruct((M, Nf), jnp.float32),
        grid=(gr, gc),
        in_specs=[
            pl.BlockSpec(memory_space=pltpu.MemorySpace.SMEM),
            pl.BlockSpec((tr, tc_in), lambda i, j: (i, j)),
        ],
        out_specs=pl.BlockSpec((tr, tc_out), lambda i, j: (i, j)),
        compiler_params=pltpu.CompilerParams(
            dimension_semantics=("parallel", "parallel"),
            vmem_limit_bytes=int(min(max(4 * tr * (tc_in + tc_out) * 4, 32 << 20), budget)),
        ),
    )(sz, y_p)


# ------------------------------- GEMM kernel --------------------------------

def _make_qlinear_gemm_kernel(tm, m_valid, m_padded):
    mask_rows = (m_padded != m_valid)

    def kernel(a_ref, w_ref, b_ref, y_ref, mn_ref, mx_ref, acc_ref):
        @pl.when(pl.program_id(2) == 0)
        def _init():
            acc_ref[...] = jnp.zeros_like(acc_ref)

        # Hot loop: MXU + DMA only (fq(x)/fq(W) are pre-materialized bf16).
        acc_ref[...] += jnp.dot(a_ref[...], w_ref[...],
                                preferred_element_type=jnp.float32)

        @pl.when(pl.program_id(2) == pl.num_programs(2) - 1)
        def _finalize():
            y = acc_ref[...] + b_ref[...]
            y_ref[...] = y
            # Per-tile scalar min/max for qo (y is not re-read from HBM).
            # Padded N columns are exactly 0 -> harmless (Qparam clamps the range
            # to include 0); padded M rows (= bias values) are masked out.
            if mask_rows:
                limit = m_valid - pl.program_id(0) * tm
                rows = lax.broadcasted_iota(jnp.int32, y.shape, 0)
                valid = rows < limit
                mn = jnp.min(jnp.where(valid, y, jnp.inf), axis=0, keepdims=True)
                mx = jnp.max(jnp.where(valid, y, -jnp.inf), axis=0, keepdims=True)
            else:
                mn = jnp.min(y, axis=0, keepdims=True)
                mx = jnp.max(y, axis=0, keepdims=True)
            mn_ref[...] = jnp.zeros_like(mn_ref) + jnp.min(mn)
            mx_ref[...] = jnp.zeros_like(mx_ref) + jnp.max(mx)

    return kernel


# ------------------------------ QLinear forward ------------------------------

def qlinear_forward(x, weight, bias):
    """Training-mode QLinear.forward: fq(x,qi) @ fq(W,qw).T + b, then fq(., qo)."""
    orig_lead = x.shape[:-1]
    K = x.shape[-1]
    Nf, Kw = weight.shape
    assert Kw == K
    M = int(math.prod(orig_lead)) if orig_lead else 1

    x2 = x.reshape(M, K).astype(jnp.float32)
    w32 = weight.astype(jnp.float32)
    b32 = bias.astype(jnp.float32)

    budget = _vmem_budget_bytes()
    big_vmem = budget >= (80 << 20)        # v5e/v6e (128 MiB VMEM) vs v7x (64 MiB/TC)

    Kp = _round_up(K, 128)
    Np = _round_up(Nf, 128)

    # Tiling: the GEMM is HBM-bandwidth bound, so use large M/N tiles for operand
    # reuse and a small K tile (tk does not affect reuse, only per-step granularity).
    tn = _pick_tile(Np, ((1024 if big_vmem else 512), 512, 256, 128))
    tk = _pick_tile(Kp, (256, 128))
    tm_cap = 1024 if big_vmem else 512
    tm = tm_cap if M >= tm_cap else _round_up(M, 8)
    Mp = _round_up(M, tm)
    gm, gn, gk = Mp // tm, Np // tn, Kp // tk

    # qi / qw statistics (global reductions, cheap in XLA).
    si, zi = qparam_scale_zp(x2)
    sw, zw = qparam_scale_zp(w32)

    # bf16 prepasses: fq + zero-pad + cast in one streaming kernel each.
    a_bf16 = fq_pad_cast(x2, si, zi, Mp, Kp, tm, budget=budget)
    wt_bf16 = fq_pad_cast(w32.T, sw, zw, Kp, Np,
                          _pick_tile(Kp, (512, 256, 128)), budget=budget)

    b_p = jnp.zeros((1, Np), jnp.float32).at[0, :Nf].set(b32)

    tile_bytes = (2 * (tm * tk * 2 + tk * tn * 2 + tm * tn * 4 + tn * 4
                       + 2 * 8 * 128 * 4)
                  + tm * tn * 4)
    vmem_limit = int(min(max(2 * tile_bytes, 32 << 20), budget))

    kernel = _make_qlinear_gemm_kernel(tm, M, Mp)
    y_p, t_mn, t_mx = pl.pallas_call(
        kernel,
        out_shape=(
            jax.ShapeDtypeStruct((Mp, Np), jnp.float32),          # y (padded)
            jax.ShapeDtypeStruct((gm * 8, gn * 128), jnp.float32),  # per-tile min
            jax.ShapeDtypeStruct((gm * 8, gn * 128), jnp.float32),  # per-tile max
        ),
        grid=(gm, gn, gk),
        in_specs=[
            pl.BlockSpec((tm, tk), lambda i, j, k: (i, k)),   # fq(x)   bf16
            pl.BlockSpec((tk, tn), lambda i, j, k: (k, j)),   # fq(W).T bf16
            pl.BlockSpec((1, tn), lambda i, j, k: (0, j)),    # bias    f32
        ],
        out_specs=(
            pl.BlockSpec((tm, tn), lambda i, j, k: (i, j)),
            pl.BlockSpec((8, 128), lambda i, j, k: (i, j)),
            pl.BlockSpec((8, 128), lambda i, j, k: (i, j)),
        ),
        scratch_shapes=[pltpu.VMEM((tm, tn), jnp.float32)],
        compiler_params=pltpu.CompilerParams(
            # "parallel" M/N axes shard across TCs on v7x; harmless no-op on v5e.
            dimension_semantics=("parallel", "parallel", "arbitrary"),
            vmem_limit_bytes=vmem_limit,
        ),
    )(a_bf16, wt_bf16, b_p)

    # qo: scale/zp from the fused per-tile min/max (no extra pass over y).
    so, zo = _scale_zp_from_minmax(jnp.min(t_mn), jnp.max(t_mx))
    out = fake_quantize_output(y_p, so, zo, M, Nf, budget=budget)
    return out.reshape(orig_lead + (Nf,))


# ------------------------------ pure-JAX reference ---------------------------

def qlinear_forward_ref(x, weight, bias):
    """Pure-JAX reference replicating the same math (incl. bf16 MXU operands)."""
    si, zi = qparam_scale_zp(x)
    xq = si * (jnp.round(jnp.clip(x * (1.0 / si) + zi, 0.0, QMAX)) - zi)
    sw, zw = qparam_scale_zp(weight)
    wq = sw * (jnp.round(jnp.clip(weight * (1.0 / sw) + zw, 0.0, QMAX)) - zw)
    K = x.shape[-1]
    y = jnp.dot(xq.reshape(-1, K).astype(jnp.bfloat16),
                wq.T.astype(jnp.bfloat16),
                preferred_element_type=jnp.float32) + bias.astype(jnp.float32)
    so, zo = qparam_scale_zp(y)
    out = so * (jnp.round(jnp.clip(y * (1.0 / so) + zo, 0.0, QMAX)) - zo)
    return out.reshape(x.shape[:-1] + (weight.shape[0],))


# ------------------------------------ main -----------------------------------

if __name__ == "__main__":
    key = jax.random.PRNGKey(0)
    k1, k2, k3 = jax.random.split(key, 3)

    B, S, IN_F, OUT_F = 2, 8, 32, 64
    x = jax.random.normal(k1, (B, S, IN_F), jnp.float32)
    weight = jax.random.normal(k2, (OUT_F, IN_F), jnp.float32) * 0.1
    bias = jax.random.normal(k3, (OUT_F,), jnp.float32) * 0.1

    out = jax.jit(qlinear_forward)(x, weight, bias)
    jax.block_until_ready(out)
    assert out.shape == (B, S, OUT_F)
    assert bool(jnp.all(jnp.isfinite(out)))

    # Loose correctness check vs the pure-JAX reference (bf16 MXU operands and
    # accumulation-order differences bound the error to ~one quantization step).
    ref = qlinear_forward_ref(x, weight, bias)
    max_diff = float(jnp.max(jnp.abs(out - ref)))
    assert max_diff < 8e-2, f"max diff vs reference too large: {max_diff}"

    print("KERNEL_OK")
</pallas_src>

<mosaic_0001>
module attributes {stable_mosaic.version = 11 : i64} {
  func.func @kernel(%arg0: i32, %arg1: i32, %arg2: memref<3xf32, #tpu.memory_space<smem>>, %arg3: memref<16x128xf32, #tpu.memory_space<vmem>>, %arg4: memref<16x64xf32, #tpu.memory_space<vmem>>) attributes {dimension_semantics = [#tpu.dimension_semantics<parallel>, #tpu.dimension_semantics<parallel>], iteration_bounds = array<i64: 1, 1>, scalar_prefetch = 0 : i64, scratch_operands = 0 : i64, tpu.core_type = #tpu.core_type<tc>, window_params = [{transform_indices = @transform_0, window_bounds = array<i64: 3>}, {transform_indices = @transform_1, window_bounds = array<i64: 16, 128>}, {transform_indices = @transform_2, window_bounds = array<i64: 16, 64>}]} {
    %c0 = arith.constant 0 : index
    %0 = memref.load %arg2[%c0] : memref<3xf32, #tpu.memory_space<smem>>
    %c1 = arith.constant 1 : index
    %1 = memref.load %arg2[%c1] : memref<3xf32, #tpu.memory_space<smem>>
    %c2 = arith.constant 2 : index
    %2 = memref.load %arg2[%c2] : memref<3xf32, #tpu.memory_space<smem>>
    %c0_0 = arith.constant 0 : index
    %c0_1 = arith.constant 0 : index
    %3 = vector.load %arg3[%c0_0, %c0_1] : memref<16x128xf32, #tpu.memory_space<vmem>>, vector<16x128xf32>
    %4 = vector.broadcast %0 : f32 to vector<16x128xf32>
    %5 = arith.mulf %3, %4 : vector<16x128xf32>
    %6 = vector.broadcast %2 : f32 to vector<16x128xf32>
    %7 = arith.addf %5, %6 : vector<16x128xf32>
    %cst = arith.constant 0.000000e+00 : f32
    %cst_2 = arith.constant 2.550000e+02 : f32
    %8 = vector.broadcast %cst : f32 to vector<16x128xf32>
    %9 = arith.maximumf %8, %7 : vector<16x128xf32>
    %10 = vector.broadcast %cst_2 : f32 to vector<16x128xf32>
    %11 = arith.minimumf %10, %9 : vector<16x128xf32>
    %12 = math.roundeven %11 : vector<16x128xf32>
    %13 = vector.broadcast %2 : f32 to vector<16x128xf32>
    %14 = arith.subf %12, %13 : vector<16x128xf32>
    %15 = vector.broadcast %1 : f32 to vector<16x128xf32>
    %16 = arith.mulf %15, %14 : vector<16x128xf32>
    %17 = vector.extract_strided_slice %16 {offsets = [0, 0], sizes = [16, 64], strides = [1, 1]} : vector<16x128xf32> to vector<16x64xf32>
    %c0_3 = arith.constant 0 : index
    %c0_4 = arith.constant 0 : index
    %18 = vector.load %arg4[%c0_3, %c0_4] : memref<16x64xf32, #tpu.memory_space<vmem>>, vector<16x64xf32>
    tpu.vector_store %arg4[%c0_3, %c0_4], %17 {strides = array<i32>} : memref<16x64xf32, #tpu.memory_space<vmem>>, vector<16x64xf32>,
    return
  }
  func.func @transform_0(%arg0: i32, %arg1: i32) -> i32 {
    %c0_i32 = arith.constant 0 : i32
    %c0_i32_0 = arith.constant 0 : i32
    return %c0_i32 : i32
  }
  func.func @transform_1(%arg0: i32, %arg1: i32) -> (i32, i32) {
    %c0_i32 = arith.constant 0 : i32
    return %arg0, %arg1 : i32, i32
  }
  func.func @transform_2(%arg0: i32, %arg1: i32) -> (i32, i32) {
    %c0_i32 = arith.constant 0 : i32
    return %arg0, %arg1 : i32, i32
  }
}

module attributes {stable_mosaic.version = 11 : i64} {
  func.func @kernel(%arg0: i32, %arg1: i32, %arg2: memref<3xf32, #tpu.memory_space<smem>>, %arg3: memref<128x128xf32, #tpu.memory_space<vmem>>, %arg4: memref<128x128xbf16, #tpu.memory_space<vmem>>) attributes {dimension_semantics = [#tpu.dimension_semantics<parallel>, #tpu.dimension_semantics<parallel>], iteration_bounds = array<i64: 1, 1>, scalar_prefetch = 0 : i64, scratch_operands = 0 : i64, tpu.core_type = #tpu.core_type<tc>, window_params = [{transform_indices = @transform_0, window_bounds = array<i64: 3>}, {transform_indices = @transform_1, window_bounds = array<i64: 128, 128>}, {transform_indices = @transform_2, window_bounds = array<i64: 128, 128>}]} {
    %c0 = arith.constant 0 : index
    %0 = memref.load %arg2[%c0] : memref<3xf32, #tpu.memory_space<smem>>
    %c1 = arith.constant 1 : index
    %1 = memref.load %arg2[%c1] : memref<3xf32, #tpu.memory_space<smem>>
    %c2 = arith.constant 2 : index
    %2 = memref.load %arg2[%c2] : memref<3xf32, #tpu.memory_space<smem>>
    %c0_0 = arith.constant 0 : index
    %c0_1 = arith.constant 0 : index
    %3 = vector.load %arg3[%c0_0, %c0_1] : memref<128x128xf32, #tpu.memory_space<vmem>>, vector<128x128xf32>
    %4 = vector.broadcast %0 : f32 to vector<128x128xf32>
    %5 = arith.mulf %3, %4 : vector<128x128xf32>
    %6 = vector.broadcast %2 : f32 to vector<128x128xf32>
    %7 = arith.addf %5, %6 : vector<128x128xf32>
    %cst = arith.constant 0.000000e+00 : f32
    %cst_2 = arith.constant 2.550000e+02 : f32
    %8 = vector.broadcast %cst : f32 to vector<128x128xf32>
    %9 = arith.maximumf %8, %7 : vector<128x128xf32>
    %10 = vector.broadcast %cst_2 : f32 to vector<128x128xf32>
    %11 = arith.minimumf %10, %9 : vector<128x128xf32>
    %12 = math.roundeven %11 : vector<128x128xf32>
    %13 = vector.broadcast %2 : f32 to vector<128x128xf32>
    %14 = arith.subf %12, %13 : vector<128x128xf32>
    %15 = vector.broadcast %1 : f32 to vector<128x128xf32>
    %16 = arith.mulf %15, %14 : vector<128x128xf32>
    %17 = tpu.iota {dimensions = array<i32: 0>} : vector<128x128xi32>
    %c128_i32 = arith.constant 128 : i32
    %18 = arith.muli %arg0, %c128_i32 : i32
    %c32_i32 = arith.constant 32 : i32
    %19 = arith.subi %c32_i32, %18 : i32
    %20 = vector.broadcast %19 : i32 to vector<128x128xi32>
    %21 = arith.cmpi slt, %17, %20 : vector<128x128xi32>
    %22 = tpu.iota {dimensions = array<i32: 1>} : vector<128x128xi32>
    %c128_i32_3 = arith.constant 128 : i32
    %23 = arith.muli %arg1, %c128_i32_3 : i32
    %c64_i32 = arith.constant 64 : i32
    %24 = arith.subi %c64_i32, %23 : i32
    %25 = vector.broadcast %24 : i32 to vector<128x128xi32>
    %26 = arith.cmpi slt, %22, %25 : vector<128x128xi32>
    %27 = arith.andi %21, %26 : vector<128x128xi1>
    %cst_4 = arith.constant 0.000000e+00 : f32
    %28 = vector.broadcast %cst_4 : f32 to vector<128x128xf32>
    %29 = arith.select %27, %16, %28 : vector<128x128xi1>, vector<128x128xf32>
    %30 = arith.truncf %29 : vector<128x128xf32> to vector<128x128xbf16>
    %c0_5 = arith.constant 0 : index
    %c0_6 = arith.constant 0 : index
    %31 = vector.load %arg4[%c0_5, %c0_6] : memref<128x128xbf16, #tpu.memory_space<vmem>>, vector<128x128xbf16>
    tpu.vector_store %arg4[%c0_5, %c0_6], %30 {strides = array<i32>} : memref<128x128xbf16, #tpu.memory_space<vmem>>, vector<128x128xbf16>,
    return
  }
  func.func @transform_0(%arg0: i32, %arg1: i32) -> i32 {
    %c0_i32 = arith.constant 0 : i32
    %c0_i32_0 = arith.constant 0 : i32
    return %c0_i32 : i32
  }
  func.func @transform_1(%arg0: i32, %arg1: i32) -> (i32, i32) {
    %c0_i32 = arith.constant 0 : i32
    return %arg0, %arg1 : i32, i32
  }
  func.func @transform_2(%arg0: i32, %arg1: i32) -> (i32, i32) {
    %c0_i32 = arith.constant 0 : i32
    return %arg0, %arg1 : i32, i32
  }
}

module attributes {stable_mosaic.version = 11 : i64} {
  func.func @kernel(%arg0: i32, %arg1: i32, %arg2: memref<3xf32, #tpu.memory_space<smem>>, %arg3: memref<16x128xf32, #tpu.memory_space<vmem>>, %arg4: memref<16x128xbf16, #tpu.memory_space<vmem>>) attributes {dimension_semantics = [#tpu.dimension_semantics<parallel>, #tpu.dimension_semantics<parallel>], iteration_bounds = array<i64: 1, 1>, scalar_prefetch = 0 : i64, scratch_operands = 0 : i64, tpu.core_type = #tpu.core_type<tc>, window_params = [{transform_indices = @transform_0, window_bounds = array<i64: 3>}, {transform_indices = @transform_1, window_bounds = array<i64: 16, 128>}, {transform_indices = @transform_2, window_bounds = array<i64: 16, 128>}]} {
    %c0 = arith.constant 0 : index
    %0 = memref.load %arg2[%c0] : memref<3xf32, #tpu.memory_space<smem>>
    %c1 = arith.constant 1 : index
    %1 = memref.load %arg2[%c1] : memref<3xf32, #tpu.memory_space<smem>>
    %c2 = arith.constant 2 : index
    %2 = memref.load %arg2[%c2] : memref<3xf32, #tpu.memory_space<smem>>
    %c0_0 = arith.constant 0 : index
    %c0_1 = arith.constant 0 : index
    %3 = vector.load %arg3[%c0_0, %c0_1] : memref<16x128xf32, #tpu.memory_space<vmem>>, vector<16x128xf32>
    %4 = vector.broadcast %0 : f32 to vector<16x128xf32>
    %5 = arith.mulf %3, %4 : vector<16x128xf32>
    %6 = vector.broadcast %2 : f32 to vector<16x128xf32>
    %7 = arith.addf %5, %6 : vector<16x128xf32>
    %cst = arith.constant 0.000000e+00 : f32
    %cst_2 = arith.constant 2.550000e+02 : f32
    %8 = vector.broadcast %cst : f32 to vector<16x128xf32>
    %9 = arith.maximumf %8, %7 : vector<16x128xf32>
    %10 = vector.broadcast %cst_2 : f32 to vector<16x128xf32>
    %11 = arith.minimumf %10, %9 : vector<16x128xf32>
    %12 = math.roundeven %11 : vector<16x128xf32>
    %13 = vector.broadcast %2 : f32 to vector<16x128xf32>
    %14 = arith.subf %12, %13 : vector<16x128xf32>
    %15 = vector.broadcast %1 : f32 to vector<16x128xf32>
    %16 = arith.mulf %15, %14 : vector<16x128xf32>
    %17 = tpu.iota {dimensions = array<i32: 1>} : vector<16x128xi32>
    %c128_i32 = arith.constant 128 : i32
    %18 = arith.muli %arg1, %c128_i32 : i32
    %c32_i32 = arith.constant 32 : i32
    %19 = arith.subi %c32_i32, %18 : i32
    %20 = vector.broadcast %19 : i32 to vector<16x128xi32>
    %21 = arith.cmpi slt, %17, %20 : vector<16x128xi32>
    %cst_3 = arith.constant 0.000000e+00 : f32
    %22 = vector.broadcast %cst_3 : f32 to vector<16x128xf32>
    %23 = arith.select %21, %16, %22 : vector<16x128xi1>, vector<16x128xf32>
    %24 = arith.truncf %23 : vector<16x128xf32> to vector<16x128xbf16>
    %c0_4 = arith.constant 0 : index
    %c0_5 = arith.constant 0 : index
    %25 = vector.load %arg4[%c0_4, %c0_5] : memref<16x128xbf16, #tpu.memory_space<vmem>>, vector<16x128xbf16>
    tpu.vector_store %arg4[%c0_4, %c0_5], %24 {strides = array<i32>} : memref<16x128xbf16, #tpu.memory_space<vmem>>, vector<16x128xbf16>,
    return
  }
  func.func @transform_0(%arg0: i32, %arg1: i32) -> i32 {
    %c0_i32 = arith.constant 0 : i32
    %c0_i32_0 = arith.constant 0 : i32
    return %c0_i32 : i32
  }
  func.func @transform_1(%arg0: i32, %arg1: i32) -> (i32, i32) {
    %c0_i32 = arith.constant 0 : i32
    return %arg0, %arg1 : i32, i32
  }
  func.func @transform_2(%arg0: i32, %arg1: i32) -> (i32, i32) {
    %c0_i32 = arith.constant 0 : i32
    return %arg0, %arg1 : i32, i32
  }
}

module attributes {stable_mosaic.version = 11 : i64} {
  func.func @kernel(%arg0: i32, %arg1: i32, %arg2: i32, %arg3: memref<16x128xbf16, #tpu.memory_space<vmem>>, %arg4: memref<128x128xbf16, #tpu.memory_space<vmem>>, %arg5: memref<1x128xf32, #tpu.memory_space<vmem>>, %arg6: memref<16x128xf32, #tpu.memory_space<vmem>>, %arg7: memref<8x128xf32, #tpu.memory_space<vmem>>, %arg8: memref<8x128xf32, #tpu.memory_space<vmem>>, %arg9: memref<16x128xf32, #tpu.memory_space<vmem>>) attributes {dimension_semantics = [#tpu.dimension_semantics<parallel>, #tpu.dimension_semantics<parallel>, #tpu.dimension_semantics<arbitrary>], iteration_bounds = array<i64: 1, 1, 1>, scalar_prefetch = 0 : i64, scratch_operands = 1 : i64, tpu.core_type = #tpu.core_type<tc>, window_params = [{transform_indices = @transform_0, window_bounds = array<i64: 16, 128>}, {transform_indices = @transform_1, window_bounds = array<i64: 128, 128>}, {transform_indices = @transform_2, window_bounds = array<i64: 1, 128>}, {transform_indices = @transform_3, window_bounds = array<i64: 16, 128>}, {transform_indices = @transform_4, window_bounds = array<i64: 8, 128>}, {transform_indices = @transform_5, window_bounds = array<i64: 8, 128>}]} {
    %c0_i32 = arith.constant 0 : i32
    %0 = arith.cmpi eq, %arg2, %c0_i32 : i32
    %1 = arith.extui %0 : i1 to i32
    %c0_i32_0 = arith.constant 0 : i32
    %2 = arith.cmpi ne, %1, %c0_i32_0 : i32
    scf.if %2 {
      %cst_10 = arith.constant 0.000000e+00 : f32
      %12 = vector.broadcast %cst_10 : f32 to vector<16x128xf32>
      %c0_11 = arith.constant 0 : index
      %c0_12 = arith.constant 0 : index
      %13 = vector.load %arg9[%c0_11, %c0_12] : memref<16x128xf32, #tpu.memory_space<vmem>>, vector<16x128xf32>
      tpu.vector_store %arg9[%c0_11, %c0_12], %12 {strides = array<i32>} : memref<16x128xf32, #tpu.memory_space<vmem>>, vector<16x128xf32>,
    } else {
    }
    %c0 = arith.constant 0 : index
    %c0_1 = arith.constant 0 : index
    %3 = vector.load %arg9[%c0, %c0_1] : memref<16x128xf32, #tpu.memory_space<vmem>>, vector<16x128xf32>
    %c0_2 = arith.constant 0 : index
    %c0_3 = arith.constant 0 : index
    %4 = vector.load %arg3[%c0_2, %c0_3] : memref<16x128xbf16, #tpu.memory_space<vmem>>, vector<16x128xbf16>
    %c0_4 = arith.constant 0 : index
    %c0_5 = arith.constant 0 : index
    %5 = vector.load %arg4[%c0_4, %c0_5] : memref<128x128xbf16, #tpu.memory_space<vmem>>, vector<128x128xbf16>
    %cst = arith.constant dense<0.000000e+00> : vector<16x128xf32>
    %6 = tpu.matmul %4, %5, %cst {dimension_numbers = #tpu.dot_dimension_numbers<[1], [0], [0], [1], [0, 0, 1, 1], [], []>} : vector<16x128xbf16>, vector<128x128xbf16>, vector<16x128xf32> -> vector<16x128xf32>
    %7 = arith.addf %3, %6 : vector<16x128xf32>
    %c0_6 = arith.constant 0 : index
    %c0_7 = arith.constant 0 : index
    %8 = vector.load %arg9[%c0_6, %c0_7] : memref<16x128xf32, #tpu.memory_space<vmem>>, vector<16x128xf32>
    tpu.vector_store %arg9[%c0_6, %c0_7], %7 {strides = array<i32>} : memref<16x128xf32, #tpu.memory_space<vmem>>, vector<16x128xf32>,
    %c0_i32_8 = arith.constant 0 : i32
    %9 = arith.cmpi eq, %arg2, %c0_i32_8 : i32
    %10 = arith.extui %9 : i1 to i32
    %c0_i32_9 = arith.constant 0 : i32
    %11 = arith.cmpi ne, %10, %c0_i32_9 : i32
    scf.if %11 {
      %c0_10 = arith.constant 0 : index
      %c0_11 = arith.constant 0 : index
      %12 = vector.load %arg9[%c0_10, %c0_11] : memref<16x128xf32, #tpu.memory_space<vmem>>, vector<16x128xf32>
      %c0_12 = arith.constant 0 : index
      %c0_13 = arith.constant 0 : index
      %13 = vector.load %arg5[%c0_12, %c0_13] : memref<1x128xf32, #tpu.memory_space<vmem>>, vector<1x128xf32>
      %14 = vector.broadcast %13 : vector<1x128xf32> to vector<16x128xf32>
      %15 = arith.addf %12, %14 : vector<16x128xf32>
      %c0_14 = arith.constant 0 : index
      %c0_15 = arith.constant 0 : index
      %16 = vector.load %arg6[%c0_14, %c0_15] : memref<16x128xf32, #tpu.memory_space<vmem>>, vector<16x128xf32>
      tpu.vector_store %arg6[%c0_14, %c0_15], %15 {strides = array<i32>} : memref<16x128xf32, #tpu.memory_space<vmem>>, vector<16x128xf32>,
      %cst_16 = arith.constant dense<0x7F800000> : vector<128xf32>
      %17 = vector.multi_reduction <minimumf>, %15, %cst_16 [0] : vector<16x128xf32> to vector<128xf32>
      %18 = vector.shape_cast %17 : vector<128xf32> to vector<1x128xf32>
      %cst_17 = arith.constant dense<0xFF800000> : vector<128xf32>
      %19 = vector.multi_reduction <maximumf>, %15, %cst_17 [0] : vector<16x128xf32> to vector<128xf32>
      %20 = vector.shape_cast %19 : vector<128xf32> to vector<1x128xf32>
      %cst_18 = arith.constant 0.000000e+00 : f32
      %21 = vector.broadcast %cst_18 : f32 to vector<8x128xf32>
      %22 = vector.shape_cast %18 : vector<1x128xf32> to vector<1x1x128xf32>
      %cst_19 = arith.constant dense<0x7F800000> : vector<1xf32>
      %23 = vector.multi_reduction <minimumf>, %22, %cst_19 [1, 2] : vector<1x1x128xf32> to vector<1xf32>
      %24 = vector.shape_cast %23 : vector<1xf32> to vector<1x1x1xf32>
      %25 = vector.extract %24[0, 0, 0] : f32 from vector<1x1x1xf32>
      %26 = vector.broadcast %25 : f32 to vector<8x128xf32>
      %27 = arith.addf %21, %26 : vector<8x128xf32>
      %c0_20 = arith.constant 0 : index
      %c0_21 = arith.constant 0 : index
      %28 = vector.load %arg7[%c0_20, %c0_21] : memref<8x128xf32, #tpu.memory_space<vmem>>, vector<8x128xf32>
      tpu.vector_store %arg7[%c0_20, %c0_21], %27 {strides = array<i32>} : memref<8x128xf32, #tpu.memory_space<vmem>>, vector<8x128xf32>,
      %cst_22 = arith.constant 0.000000e+00 : f32
      %29 = vector.broadcast %cst_22 : f32 to vector<8x128xf32>
      %30 = vector.shape_cast %20 : vector<1x128xf32> to vector<1x1x128xf32>
      %cst_23 = arith.constant dense<0xFF800000> : vector<1xf32>
      %31 = vector.multi_reduction <maximumf>, %30, %cst_23 [1, 2] : vector<1x1x128xf32> to vector<1xf32>
      %32 = vector.shape_cast %31 : vector<1xf32> to vector<1x1x1xf32>
      %33 = vector.extract %32[0, 0, 0] : f32 from vector<1x1x1xf32>
      %34 = vector.broadcast %33 : f32 to vector<8x128xf32>
      %35 = arith.addf %29, %34 : vector<8x128xf32>
      %c0_24 = arith.constant 0 : index
      %c0_25 = arith.constant 0 : index
      %36 = vector.load %arg8[%c0_24, %c0_25] : memref<8x128xf32, #tpu.memory_space<vmem>>, vector<8x128xf32>
      tpu.vector_store %arg8[%c0_24, %c0_25], %35 {strides = array<i32>} : memref<8x128xf32, #tpu.memory_space<vmem>>, vector<8x128xf32>,
    } else {
    }
    return
  }
  func.func @transform_0(%arg0: i32, %arg1: i32, %arg2: i32) -> (i32, i32) {
    %c0_i32 = arith.constant 0 : i32
    return %arg0, %arg2 : i32, i32
  }
  func.func @transform_1(%arg0: i32, %arg1: i32, %arg2: i32) -> (i32, i32) {
    %c0_i32 = arith.constant 0 : i32
    return %arg2, %arg1 : i32, i32
  }
  func.func @transform_2(%arg0: i32, %arg1: i32, %arg2: i32) -> (i32, i32) {
    %c0_i32 = arith.constant 0 : i32
    %c0_i32_0 = arith.constant 0 : i32
    return %c0_i32, %arg1 : i32, i32
  }
  func.func @transform_3(%arg0: i32, %arg1: i32, %arg2: i32) -> (i32, i32) {
    %c0_i32 = arith.constant 0 : i32
    return %arg0, %arg1 : i32, i32
  }
  func.func @transform_4(%arg0: i32, %arg1: i32, %arg2: i32) -> (i32, i32) {
    %c0_i32 = arith.constant 0 : i32
    return %arg0, %arg1 : i32, i32
  }
  func.func @transform_5(%arg0: i32, %arg1: i32, %arg2: i32) -> (i32, i32) {
    %c0_i32 = arith.constant 0 : i32
    return %arg0, %arg1 : i32, i32
  }
}

</mosaic_0001>

<llo_original>
// kernel: qlinear_forward.4
$region0: #{qlinear_forward.4}
  #allocation0 [shape = 'u32[]', space=smem, size = 0x4, offset = 0x4, fixed_abs, tag = 'smem constant byte address 0x4 - core index']
  #allocation1 [shape = 'u32[144,128]{1,0:T(1,128)}', space=vmem, size = 0x12000, scoped, tag = 'internal scratch']
  %s0 = inlined_call_operand.vmem [shape: f32[3], index: 0, kind: input, shape index: {}]
  %s1 = inlined_call_operand.vmem [shape: f32[16,32], index: 1, kind: input, shape index: {}]
  %s2 = inlined_call_operand.vmem [shape: bf16[16,128], index: 2, kind: output, shape index: {}]
  %s3 = sld [smem:[#allocation0]]
  $region22: #{qlinear_forward.4} parent=0
    _
  %s5 = ssub.s32 1, %s3
  %s6 = scalar_select 0, %s5, %s3
  $region1: #{qlinear_forward.4} parent=0
    #allocation2 [shape = 'u8[512]{0}', space=smem, size = 0x200, scoped, tag = 'input window, operand 0, single buffered']
    #allocation3 [shape = 's32[1]{0}', space=sflag, size = 0x4, scoped, tag = 'scoped memory for qlinear_forward.4']
    %7 = vsyncpa [#allocation3], 0
    // Predicated region
    $region2: #{qlinear_forward.4} parent=1 // pred_check
      _
    $region3: #{qlinear_forward.4} parent=1 // pred_check_branch
      %9 = sbr.rel (0) target = $region5
    $region4: #{qlinear_forward.4} parent=1 // pred_region
      %s11 = ssub.s32 16, 16
      %12 = vsyncadd [#allocation3], %s11
      %s14 = sshll.u32 %s0, 4
      %s15 = int_to_ptr.vmem [resolvable:$true] %s14
      %17 = dma.vmem_to_smem %s15, 16, [#allocation2], [#allocation3]
    $region5: #{qlinear_forward.4} parent=1 // pred_fallthru
      _
    // Predicated region
    $region6: #{qlinear_forward.4} parent=1 // pred_check
      _
    $region7: #{qlinear_forward.4} parent=1 // pred_check_branch
      %19 = sbr.rel (0) target = $region9
    $region8: #{qlinear_forward.4} parent=1 // pred_region
      _
    $region9: #{qlinear_forward.4} parent=1 // pred_fallthru
      _
    // Predicated region
    $region10: #{qlinear_forward.4} parent=1 // pred_check
      _
    $region11: #{qlinear_forward.4} parent=1 // pred_check_branch
      %21 = sbr.rel (0) target = $region13
    $region12: #{qlinear_forward.4} parent=1 // pred_region
      %22 = dma.done [#allocation3], 16
    $region13: #{qlinear_forward.4} parent=1 // pred_fallthru
      _
    %23 = sfence
    %s24 = sld [smem:[#allocation2]]
    %s25 = sld [smem:[#allocation2 + $0x1]]
    %s26 = sld [smem:[#allocation2 + $0x2]]
    %v27 = vld [vmem:[%s1] sm:$0xff]
    %v28 = vld [vmem:[%s1 + $0x8] sm:$0xff]
    %v29 = vstv %s24
    %v30 = vmul.f32 %v27, %v29
    %v31 = vmul.f32 %v28, %v29
    %v32 = vstv %s26
    %v33 = vadd.f32 %v30, %v32
    %v34 = vadd.f32 %v31, %v32
    %v35 = vmax.f32 %v33, 0.0
    %v36 = vmax.f32 %v34, 0.0
    %v37 = vmin.f32 %v35, 255.0
    %v38 = vmin.f32 %v36, 255.0
    %v39 = vround.ne.pseudo %v37
    %v40 = vround.ne.pseudo %v38
    %v41 = vsub.f32 %v39, %v32
    %v42 = vsub.f32 %v40, %v32
    %v43 = vstv %s25
    %v44 = vmul.f32 %v43, %v41
    %v45 = vmul.f32 %v43, %v42
    %v46 = vlaneseq
    %v47 = vand.u32 %v46, 127
    %s48 = smul.u32 0, 128
    %s49 = ssub.s32 32, %s48
    %v50 = vstv %s49
    %vm51 = vcmp.lt.s32.totalorder %v47, %v50
    %v52 = vsel %vm51, %v44, 0.0
    %v53 = vsel %vm51, %v45, 0.0
    %v54 = vpack.c.bf16 %v53, %v52
    %v56 = vunpack.c.l.b16 %v54
    %v57 = vunpack.c.h.b16 %v54
    %v58 = vpack.c.b16 %v56, %v56
    %v59 = vpack.c.b16 %v57, %v57
    %62 = vst [vmem:[%s2] sm:$0xf] %v58
    %63 = vst [vmem:[%s2 + $0x4] sm:$0xf] %v59
    // Predicated region
    $region14: #{qlinear_forward.4} parent=1 // pred_check
      _
    $region15: #{qlinear_forward.4} parent=1 // pred_check_branch
      %65 = sbr.rel (0) target = $region17
    $region16: #{qlinear_forward.4} parent=1 // pred_region
      _
    $region17: #{qlinear_forward.4} parent=1 // pred_fallthru
      _
    // Predicated region
    $region18: #{qlinear_forward.4} parent=1 // pred_check
      _
    $region19: #{qlinear_forward.4} parent=1 // pred_check_branch
      %67 = sbr.rel (0) target = $region21
    $region20: #{qlinear_forward.4} parent=1 // pred_region
      _
    $region21: #{qlinear_forward.4} parent=1 // pred_fallthru
      _
    %68 = vsyncpa [#allocation3], 1

// kernel: qlinear_forward.7
$region0: #{qlinear_forward.7}
  #allocation0 [shape = 'u32[]', space=smem, size = 0x4, offset = 0x4, fixed_abs, tag = 'smem constant byte address 0x4 - core index']
  #allocation1 [shape = 'u32[144,128]{1,0:T(1,128)}', space=vmem, size = 0x12000, scoped, tag = 'internal scratch']
  %s0 = inlined_call_operand.vmem [shape: f32[3], index: 0, kind: input, shape index: {}]
  %s1 = inlined_call_operand.vmem [shape: f32[16,128], index: 1, kind: input, shape index: {}]
  %s2 = inlined_call_operand.hbm [shape: f32[16,64], index: 2, kind: output, shape index: {}]
  %s3 = sld [smem:[#allocation0]]
  $region22: #{qlinear_forward.7} parent=0
    _
  %s5 = ssub.s32 1, %s3
  %s6 = scalar_select 0, %s5, %s3
  $region1: #{qlinear_forward.7} parent=0
    #allocation2 [shape = 'u8[512]{0}', space=smem, size = 0x200, scoped, tag = 'input window, operand 0, single buffered']
    #allocation3 [shape = 's32[1]{0}', space=sflag, size = 0x4, scoped, tag = 'scoped memory for qlinear_forward.7']
    #allocation4 [shape = 's32[1]{0}', space=sflag, size = 0x4, scoped, tag = 'scoped memory for qlinear_forward.7']
    #allocation5 [shape = 'u8[8192]{0}', space=vmem, size = 0x2000, scoped, tag = 'output window, operand 0, single buffered']
    %7 = vsyncpa [#allocation4], 0
    %8 = vsyncpa [#allocation3], 0
    // Predicated region
    $region2: #{qlinear_forward.7} parent=1 // pred_check
      _
    $region3: #{qlinear_forward.7} parent=1 // pred_check_branch
      %10 = sbr.rel (0) target = $region5
    $region4: #{qlinear_forward.7} parent=1 // pred_region
      %s12 = ssub.s32 16, 16
      %13 = vsyncadd [#allocation4], %s12
      %s15 = sshll.u32 %s0, 4
      %s16 = int_to_ptr.vmem [resolvable:$true] %s15
      %18 = dma.vmem_to_smem %s16, 16, [#allocation2], [#allocation4]
    $region5: #{qlinear_forward.7} parent=1 // pred_fallthru
      _
    // Predicated region
    $region6: #{qlinear_forward.7} parent=1 // pred_check
      _
    $region7: #{qlinear_forward.7} parent=1 // pred_check_branch
      %20 = sbr.rel (0) target = $region9
    $region8: #{qlinear_forward.7} parent=1 // pred_region
      _
    $region9: #{qlinear_forward.7} parent=1 // pred_fallthru
      _
    // Predicated region
    $region10: #{qlinear_forward.7} parent=1 // pred_check
      _
    $region11: #{qlinear_forward.7} parent=1 // pred_check_branch
      %22 = sbr.rel (0) target = $region13
    $region12: #{qlinear_forward.7} parent=1 // pred_region
      %23 = dma.done [#allocation4], 16
    $region13: #{qlinear_forward.7} parent=1 // pred_fallthru
      _
    %24 = sfence
    %s25 = sld [smem:[#allocation2]]
    %s26 = sld [smem:[#allocation2 + $0x1]]
    %s27 = sld [smem:[#allocation2 + $0x2]]
    %v28 = vld [vmem:[%s1] sm:$0xff]
    %v29 = vld [vmem:[%s1 + $0x8] sm:$0xff]
    %v30 = vstv %s25
    %v31 = vmul.f32 %v28, %v30
    %v32 = vmul.f32 %v29, %v30
    %v33 = vstv %s27
    %v34 = vadd.f32 %v31, %v33
    %v35 = vadd.f32 %v32, %v33
    %v36 = vmax.f32 %v34, 0.0
    %v37 = vmax.f32 %v35, 0.0
    %v38 = vmin.f32 %v36, 255.0
    %v39 = vmin.f32 %v37, 255.0
    %v40 = vround.ne.pseudo %v38
    %v41 = vround.ne.pseudo %v39
    %v42 = vsub.f32 %v40, %v33
    %v43 = vsub.f32 %v41, %v33
    %v44 = vstv %s26
    %v45 = vmul.f32 %v44, %v42
    %v46 = vmul.f32 %v44, %v43
    %vm47 = vcmask 523264
    %48 = vst.msk [vmem:[#allocation5] sm:$0xff] %vm47, %v45
    %49 = vst.msk [vmem:[#allocation5 + $0x8] sm:$0xff] %vm47, %v46
    // Predicated region
    $region14: #{qlinear_forward.7} parent=1 // pred_check
      _
    $region15: #{qlinear_forward.7} parent=1 // pred_check_branch
      %51 = sbr.rel (0) target = $region17
    $region16: #{qlinear_forward.7} parent=1 // pred_region
      %s53 = ssub.s32 256, 256
      %54 = vsyncadd [#allocation3], %s53
      %s55 = sshll.u32 [#allocation5], 4
      %s56 = int_to_ptr.vmem [resolvable:$true] %s55
      %61 = dma.vmem_to_hbm [thread:$0]  %s56, 256, %s2, [#allocation3], 128, 128, 8
    $region17: #{qlinear_forward.7} parent=1 // pred_fallthru
      _
    // Predicated region
    $region18: #{qlinear_forward.7} parent=1 // pred_check
      _
    $region19: #{qlinear_forward.7} parent=1 // pred_check_branch
      %63 = sbr.rel (0) target = $region21
    $region20: #{qlinear_forward.7} parent=1 // pred_region
      %64 = dma.done [#allocation3], 256
    $region21: #{qlinear_forward.7} parent=1 // pred_fallthru
      _
    %65 = vsyncpa [#allocation3], 1
    %66 = vsyncpa [#allocation4], 1

// kernel: qlinear_forward.5
$region0: #{qlinear_forward.5}
  #allocation0 [shape = 'u32[]', space=smem, size = 0x4, offset = 0x4, fixed_abs, tag = 'smem constant byte address 0x4 - core index']
  #allocation1 [shape = 'u32[144,128]{1,0:T(1,128)}', space=vmem, size = 0x12000, scoped, tag = 'internal scratch']
  %s0 = inlined_call_operand.vmem [shape: f32[3], index: 0, kind: input, shape index: {}]
  %s1 = inlined_call_operand.vmem [shape: f32[32,64], index: 1, kind: input, shape index: {}]
  %s2 = inlined_call_operand.vmem [shape: bf16[128,128], index: 2, kind: output, shape index: {}]
  %s3 = sld [smem:[#allocation0]]
  $region22: #{qlinear_forward.5} parent=0
    _
  %s5 = ssub.s32 1, %s3
  %s6 = scalar_select 0, %s5, %s3
  $region1: #{qlinear_forward.5} parent=0
    #allocation2 [shape = 'u8[512]{0}', space=smem, size = 0x200, scoped, tag = 'input window, operand 0, single buffered']
    #allocation3 [shape = 's32[1]{0}', space=sflag, size = 0x4, scoped, tag = 'scoped memory for qlinear_forward.5']
    %7 = vsyncpa [#allocation3], 0
    // Predicated region
    $region2: #{qlinear_forward.5} parent=1 // pred_check
      _
    $region3: #{qlinear_forward.5} parent=1 // pred_check_branch
      %9 = sbr.rel (0) target = $region5
    $region4: #{qlinear_forward.5} parent=1 // pred_region
      %s11 = ssub.s32 16, 16
      %12 = vsyncadd [#allocation3], %s11
      %s14 = sshll.u32 %s0, 4
      %s15 = int_to_ptr.vmem [resolvable:$true] %s14
      %17 = dma.vmem_to_smem %s15, 16, [#allocation2], [#allocation3]
    $region5: #{qlinear_forward.5} parent=1 // pred_fallthru
      _
    // Predicated region
    $region6: #{qlinear_forward.5} parent=1 // pred_check
      _
    $region7: #{qlinear_forward.5} parent=1 // pred_check_branch
      %19 = sbr.rel (0) target = $region9
    $region8: #{qlinear_forward.5} parent=1 // pred_region
      _
    $region9: #{qlinear_forward.5} parent=1 // pred_fallthru
      _
    // Predicated region
    $region10: #{qlinear_forward.5} parent=1 // pred_check
      _
    $region11: #{qlinear_forward.5} parent=1 // pred_check_branch
      %21 = sbr.rel (0) target = $region13
    $region12: #{qlinear_forward.5} parent=1 // pred_region
      %22 = dma.done [#allocation3], 16
    $region13: #{qlinear_forward.5} parent=1 // pred_fallthru
      _
    %23 = sfence
    %s24 = sld [smem:[#allocation2]]
    %s25 = sld [smem:[#allocation2 + $0x1]]
    %s26 = sld [smem:[#allocation2 + $0x2]]
    %v27 = vld [vmem:[%s1] sm:$0xff]
    %v28 = vld [vmem:[%s1 + $0x8] sm:$0xff]
    %v29 = vld [vmem:[%s1 + $0x10] sm:$0xff]
    %v30 = vld [vmem:[%s1 + $0x18] sm:$0xff]
    %v31 = vld [vmem:[%s1 + $0x20] sm:$0xff]
    %v32 = vld [vmem:[%s1 + $0x28] sm:$0xff]
    %v33 = vld [vmem:[%s1 + $0x30] sm:$0xff]
    %v34 = vld [vmem:[%s1 + $0x38] sm:$0xff]
    %v35 = vld [vmem:[%s1 + $0x40] sm:$0xff]
    %v36 = vld [vmem:[%s1 + $0x48] sm:$0xff]
    %v37 = vld [vmem:[%s1 + $0x50] sm:$0xff]
    %v38 = vld [vmem:[%s1 + $0x58] sm:$0xff]
    %v39 = vld [vmem:[%s1 + $0x60] sm:$0xff]
    %v40 = vld [vmem:[%s1 + $0x68] sm:$0xff]
    %v41 = vld [vmem:[%s1 + $0x70] sm:$0xff]
    %v42 = vld [vmem:[%s1 + $0x78] sm:$0xff]
    %v43 = vstv %s24
    %v44 = vmul.f32 %v27, %v43
    %v45 = vmul.f32 %v28, %v43
    %v46 = vmul.f32 %v29, %v43
    %v47 = vmul.f32 %v30, %v43
    %v48 = vmul.f32 %v31, %v43
    %v49 = vmul.f32 %v32, %v43
    %v50 = vmul.f32 %v33, %v43
    %v51 = vmul.f32 %v34, %v43
    %v52 = vmul.f32 %v35, %v43
    %v53 = vmul.f32 %v36, %v43
    %v54 = vmul.f32 %v37, %v43
    %v55 = vmul.f32 %v38, %v43
    %v56 = vmul.f32 %v39, %v43
    %v57 = vmul.f32 %v40, %v43
    %v58 = vmul.f32 %v41, %v43
    %v59 = vmul.f32 %v42, %v43
    %v60 = vstv %s26
    %v61 = vadd.f32 %v44, %v60
    %v62 = vadd.f32 %v45, %v60
    %v63 = vadd.f32 %v46, %v60
    %v64 = vadd.f32 %v47, %v60
    %v65 = vadd.f32 %v48, %v60
    %v66 = vadd.f32 %v49, %v60
    %v67 = vadd.f32 %v50, %v60
    %v68 = vadd.f32 %v51, %v60
    %v69 = vadd.f32 %v52, %v60
    %v70 = vadd.f32 %v53, %v60
    %v71 = vadd.f32 %v54, %v60
    %v72 = vadd.f32 %v55, %v60
    %v73 = vadd.f32 %v56, %v60
    %v74 = vadd.f32 %v57, %v60
    %v75 = vadd.f32 %v58, %v60
    %v76 = vadd.f32 %v59, %v60
    %v77 = vmax.f32 %v61, 0.0
    %v78 = vmax.f32 %v62, 0.0
    %v79 = vmax.f32 %v63, 0.0
    %v80 = vmax.f32 %v64, 0.0
    %v81 = vmax.f32 %v65, 0.0
    %v82 = vmax.f32 %v66, 0.0
    %v83 = vmax.f32 %v67, 0.0
    %v84 = vmax.f32 %v68, 0.0
    %v85 = vmax.f32 %v69, 0.0
    %v86 = vmax.f32 %v70, 0.0
    %v87 = vmax.f32 %v71, 0.0
    %v88 = vmax.f32 %v72, 0.0
    %v89 = vmax.f32 %v73, 0.0
    %v90 = vmax.f32 %v74, 0.0
    %v91 = vmax.f32 %v75, 0.0
    %v92 = vmax.f32 %v76, 0.0
    %v93 = vmin.f32 %v77, 255.0
    %v94 = vmin.f32 %v78, 255.0
    %v95 = vmin.f32 %v79, 255.0
    %v96 = vmin.f32 %v80, 255.0
    %v97 = vmin.f32 %v81, 255.0
    %v98 = vmin.f32 %v82, 255.0
    %v99 = vmin.f32 %v83, 255.0
    %v100 = vmin.f32 %v84, 255.0
    %v101 = vmin.f32 %v85, 255.0
    %v102 = vmin.f32 %v86, 255.0
    %v103 = vmin.f32 %v87, 255.0
    %v104 = vmin.f32 %v88, 255.0
    %v105 = vmin.f32 %v89, 255.0
    %v106 = vmin.f32 %v90, 255.0
    %v107 = vmin.f32 %v91, 255.0
    %v108 = vmin.f32 %v92, 255.0
    %v109 = vround.ne.pseudo %v93
    %v110 = vround.ne.pseudo %v94
    %v111 = vround.ne.pseudo %v95
    %v112 = vround.ne.pseudo %v96
    %v113 = vround.ne.pseudo %v97
    %v114 = vround.ne.pseudo %v98
    %v115 = vround.ne.pseudo %v99
    %v116 = vround.ne.pseudo %v100
    %v117 = vround.ne.pseudo %v101
    %v118 = vround.ne.pseudo %v102
    %v119 = vround.ne.pseudo %v103
    %v120 = vround.ne.pseudo %v104
    %v121 = vround.ne.pseudo %v105
    %v122 = vround.ne.pseudo %v106
    %v123 = vround.ne.pseudo %v107
    %v124 = vround.ne.pseudo %v108
    %v125 = vsub.f32 %v109, %v60
    %v126 = vsub.f32 %v110, %v60
    %v127 = vsub.f32 %v111, %v60
    %v128 = vsub.f32 %v112, %v60
    %v129 = vsub.f32 %v113, %v60
    %v130 = vsub.f32 %v114, %v60
    %v131 = vsub.f32 %v115, %v60
    %v132 = vsub.f32 %v116, %v60
    %v133 = vsub.f32 %v117, %v60
    %v134 = vsub.f32 %v118, %v60
    %v135 = vsub.f32 %v119, %v60
    %v136 = vsub.f32 %v120, %v60
    %v137 = vsub.f32 %v121, %v60
    %v138 = vsub.f32 %v122, %v60
    %v139 = vsub.f32 %v123, %v60
    %v140 = vsub.f32 %v124, %v60
    %v141 = vstv %s25
    %v142 = vmul.f32 %v141, %v125
    %v143 = vmul.f32 %v141, %v126
    %v144 = vmul.f32 %v141, %v127
    %v145 = vmul.f32 %v141, %v128
    %v146 = vmul.f32 %v141, %v129
    %v147 = vmul.f32 %v141, %v130
    %v148 = vmul.f32 %v141, %v131
    %v149 = vmul.f32 %v141, %v132
    %v150 = vmul.f32 %v141, %v133
    %v151 = vmul.f32 %v141, %v134
    %v152 = vmul.f32 %v141, %v135
    %v153 = vmul.f32 %v141, %v136
    %v154 = vmul.f32 %v141, %v137
    %v155 = vmul.f32 %v141, %v138
    %v156 = vmul.f32 %v141, %v139
    %v157 = vmul.f32 %v141, %v140
    %v158 = vlaneseq
    %v159 = vshrl.u32 %v158, 7
    %v160 = vadd.s32 %v159, 8
    %v161 = vadd.s32 %v159, 16
    %v162 = vadd.s32 %v159, 24
    %v163 = vadd.s32 %v159, 32
    %v164 = vadd.s32 %v159, 40
    %v165 = vadd.s32 %v159, 48
    %v166 = vadd.s32 %v159, 56
    %v167 = vadd.s32 %v159, 64
    %v168 = vadd.s32 %v159, 72
    %v169 = vadd.s32 %v159, 80
    %v170 = vadd.s32 %v159, 88
    %v171 = vadd.s32 %v159, 96
    %v172 = vadd.s32 %v159, 104
    %v173 = vadd.s32 %v159, 112
    %v174 = vadd.s32 %v159, 120
    %s175 = smul.u32 0, 128
    %s176 = ssub.s32 32, %s175
    %v177 = vstv %s176
    %vm178 = vcmp.lt.s32.totalorder %v159, %v177
    %vm179 = vcmp.lt.s32.totalorder %v160, %v177
    %vm180 = vcmp.lt.s32.totalorder %v161, %v177
    %vm181 = vcmp.lt.s32.totalorder %v162, %v177
    %vm182 = vcmp.lt.s32.totalorder %v163, %v177
    %vm183 = vcmp.lt.s32.totalorder %v164, %v177
    %vm184 = vcmp.lt.s32.totalorder %v165, %v177
    %vm185 = vcmp.lt.s32.totalorder %v166, %v177
    %vm186 = vcmp.lt.s32.totalorder %v167, %v177
    %vm187 = vcmp.lt.s32.totalorder %v168, %v177
    %vm188 = vcmp.lt.s32.totalorder %v169, %v177
    %vm189 = vcmp.lt.s32.totalorder %v170, %v177
    %vm190 = vcmp.lt.s32.totalorder %v171, %v177
    %vm191 = vcmp.lt.s32.totalorder %v172, %v177
    %vm192 = vcmp.lt.s32.totalorder %v173, %v177
    %vm193 = vcmp.lt.s32.totalorder %v174, %v177
    %v194 = vlaneseq
    %v195 = vand.u32 %v194, 127
    %s196 = smul.u32 0, 128
    %s197 = ssub.s32 64, %s196
    %v198 = vstv %s197
    %vm199 = vcmp.lt.s32.totalorder %v195, %v198
    %vm200 = vmand %vm178, %vm199
    %vm201 = vmand %vm179, %vm199
    %vm202 = vmand %vm180, %vm199
    %vm203 = vmand %vm181, %vm199
    %vm204 = vmand %vm182, %vm199
    %vm205 = vmand %vm183, %vm199
    %vm206 = vmand %vm184, %vm199
    %vm207 = vmand %vm185, %vm199
    %vm208 = vmand %vm186, %vm199
    %vm209 = vmand %vm187, %vm199
    %vm210 = vmand %vm188, %vm199
    %vm211 = vmand %vm189, %vm199
    %vm212 = vmand %vm190, %vm199
    %vm213 = vmand %vm191, %vm199
    %vm214 = vmand %vm192, %vm199
    %vm215 = vmand %vm193, %vm199
    %v216 = vsel %vm200, %v142, 0.0
    %v217 = vsel %vm201, %v143, 0.0
    %v218 = vsel %vm202, %v144, 0.0
    %v219 = vsel %vm203, %v145, 0.0
    %v220 = vsel %vm204, %v146, 0.0
    %v221 = vsel %vm205, %v147, 0.0
    %v222 = vsel %vm206, %v148, 0.0
    %v223 = vsel %vm207, %v149, 0.0
    %v224 = vsel %vm208, %v150, 0.0
    %v225 = vsel %vm209, %v151, 0.0
    %v226 = vsel %vm210, %v152, 0.0
    %v227 = vsel %vm211, %v153, 0.0
    %v228 = vsel %vm212, %v154, 0.0
    %v229 = vsel %vm213, %v155, 0.0
    %v230 = vsel %vm214, %v156, 0.0
    %v231 = vsel %vm215, %v157, 0.0
    %v232 = vpack.c.bf16 %v217, %v216
    %v233 = vpack.c.bf16 %v219, %v218
    %v234 = vpack.c.bf16 %v221, %v220
    %v235 = vpack.c.bf16 %v223, %v222
    %v236 = vpack.c.bf16 %v225, %v224
    %v237 = vpack.c.bf16 %v227, %v226
    %v238 = vpack.c.bf16 %v229, %v228
    %v239 = vpack.c.bf16 %v231, %v230
    %v248 = vunpack.c.l.b16 %v232
    %v249 = vunpack.c.h.b16 %v232
    %v250 = vunpack.c.l.b16 %v233
    %v251 = vunpack.c.h.b16 %v233
    %v252 = vunpack.c.l.b16 %v234
    %v253 = vunpack.c.h.b16 %v234
    %v254 = vunpack.c.l.b16 %v235
    %v255 = vunpack.c.h.b16 %v235
    %v256 = vunpack.c.l.b16 %v236
    %v257 = vunpack.c.h.b16 %v236
    %v258 = vunpack.c.l.b16 %v237
    %v259 = vunpack.c.h.b16 %v237
    %v260 = vunpack.c.l.b16 %v238
    %v261 = vunpack.c.h.b16 %v238
    %v262 = vunpack.c.l.b16 %v239
    %v263 = vunpack.c.h.b16 %v239
    %v264 = vpack.c.b16 %v248, %v248
    %v265 = vpack.c.b16 %v249, %v249
    %v266 = vpack.c.b16 %v250, %v250
    %v267 = vpack.c.b16 %v251, %v251
    %v268 = vpack.c.b16 %v252, %v252
    %v269 = vpack.c.b16 %v253, %v253
    %v270 = vpack.c.b16 %v254, %v254
    %v271 = vpack.c.b16 %v255, %v255
    %v272 = vpack.c.b16 %v256, %v256
    %v273 = vpack.c.b16 %v257, %v257
    %v274 = vpack.c.b16 %v258, %v258
    %v275 = vpack.c.b16 %v259, %v259
    %v276 = vpack.c.b16 %v260, %v260
    %v277 = vpack.c.b16 %v261, %v261
    %v278 = vpack.c.b16 %v262, %v262
    %v279 = vpack.c.b16 %v263, %v263
    %296 = vst [vmem:[%s2] sm:$0xf] %v264
    %297 = vst [vmem:[%s2 + $0x4] sm:$0xf] %v265
    %298 = vst [vmem:[%s2 + $0x8] sm:$0xf] %v266
    %299 = vst [vmem:[%s2 + $0xc] sm:$0xf] %v267
    %300 = vst [vmem:[%s2 + $0x10] sm:$0xf] %v268
    %301 = vst [vmem:[%s2 + $0x14] sm:$0xf] %v269
    %302 = vst [vmem:[%s2 + $0x18] sm:$0xf] %v270
    %303 = vst [vmem:[%s2 + $0x1c] sm:$0xf] %v271
    %304 = vst [vmem:[%s2 + $0x20] sm:$0xf] %v272
    %305 = vst [vmem:[%s2 + $0x24] sm:$0xf] %v273
    %306 = vst [vmem:[%s2 + $0x28] sm:$0xf] %v274
    %307 = vst [vmem:[%s2 + $0x2c] sm:$0xf] %v275
    %308 = vst [vmem:[%s2 + $0x30] sm:$0xf] %v276
    %309 = vst [vmem:[%s2 + $0x34] sm:$0xf] %v277
    %310 = vst [vmem:[%s2 + $0x38] sm:$0xf] %v278
    %311 = vst [vmem:[%s2 + $0x3c] sm:$0xf] %v279
    // Predicated region
    $region14: #{qlinear_forward.5} parent=1 // pred_check
      _
    $region15: #{qlinear_forward.5} parent=1 // pred_check_branch
      %313 = sbr.rel (0) target = $region17
    $region16: #{qlinear_forward.5} parent=1 // pred_region
      _
    $region17: #{qlinear_forward.5} parent=1 // pred_fallthru
      _
    // Predicated region
    $region18: #{qlinear_forward.5} parent=1 // pred_check
      _
    $region19: #{qlinear_forward.5} parent=1 // pred_check_branch
      %315 = sbr.rel (0) target = $region21
    $region20: #{qlinear_forward.5} parent=1 // pred_region
      _
    $region21: #{qlinear_forward.5} parent=1 // pred_fallthru
      _
    %316 = vsyncpa [#allocation3], 1

// kernel: qlinear_forward.6
$region0: #{qlinear_forward.6}
  #allocation0 [shape = 'u32[]', space=smem, size = 0x4, offset = 0x4, fixed_abs, tag = 'smem constant byte address 0x4 - core index']
  #allocation1 [shape = 'u32[144,128]{1,0:T(1,128)}', space=vmem, size = 0x12000, scoped, tag = 'internal scratch']
  #allocation2 [shape = 'f32[16,128]{1,0:T(8,128)}', space=vmem, size = 0x2000, scoped, tag = 'scratch operand']
  %s0 = inlined_call_operand.vmem [shape: bf16[16,128], index: 0, kind: input, shape index: {}]
  %s1 = inlined_call_operand.vmem [shape: bf16[128,128], index: 1, kind: input, shape index: {}]
  %s2 = inlined_call_operand.vmem [shape: f32[1,128], index: 2, kind: input, shape index: {}]
  %s3 = inlined_call_operand.vmem [shape: f32[16,128], index: 3, kind: output, shape index: {0}]
  %s4 = inlined_call_operand.vmem [shape: f32[8,128], index: 4, kind: output, shape index: {1}]
  %s5 = inlined_call_operand.vmem [shape: f32[8,128], index: 5, kind: output, shape index: {2}]
  %6 = xla_tuple %s3, %s4, %s5
  %s7 = sld [smem:[#allocation0]]
  $region46: #{qlinear_forward.6} parent=0
    _
  %s9 = ssub.s32 1, %s7
  %s10 = scalar_select 0, %s9, %s7
  // Predicated region
  $region2: #{qlinear_forward.6} parent=0 // pred_check
    _
  $region3: #{qlinear_forward.6} parent=0 // pred_check_branch
    %12 = sbr.rel (0) target = $region5
  $region4: #{qlinear_forward.6} parent=0 // pred_region
    _
  $region5: #{qlinear_forward.6} parent=0 // pred_fallthru
    _
  // Predicated region
  $region6: #{qlinear_forward.6} parent=0 // pred_check
    _
  $region7: #{qlinear_forward.6} parent=0 // pred_check_branch
    %14 = sbr.rel (0) target = $region9
  $region8: #{qlinear_forward.6} parent=0 // pred_region
    _
  $region9: #{qlinear_forward.6} parent=0 // pred_fallthru
    _
  // Predicated region
  $region10: #{qlinear_forward.6} parent=0 // pred_check
    _
  $region11: #{qlinear_forward.6} parent=0 // pred_check_branch
    %16 = sbr.rel (0) target = $region13
  $region12: #{qlinear_forward.6} parent=0 // pred_region
    _
  $region13: #{qlinear_forward.6} parent=0 // pred_fallthru
    _
  %p18 = scmp.eq.s32.totalorder 0, 0
  // Predicated region
  $region14: #{qlinear_forward.6} parent=0 // pred_check
    %p19 = pneg %p18
  $region15: #{qlinear_forward.6} parent=0 // pred_check_branch
    %21 = sbr.rel (%p19) target = $region17
  $region16: #{qlinear_forward.6} parent=0 // pred_region
    %22 = vst [vmem:[#allocation2] sm:$0xff] 0.0
    %23 = vst [vmem:[#allocation2 + $0x8] sm:$0xff] 0.0
  $region17: #{qlinear_forward.6} parent=0 // pred_fallthru
    _
  %v24 = vld [vmem:[#allocation2] sm:$0xff]
  %v25 = vld [vmem:[#allocation2 + $0x8] sm:$0xff]
  %v26 = vld [vmem:[%s0] sm:$0xf]
  %v27 = vld [vmem:[%s0 + $0x4] sm:$0xf]
  %v28 = vld [vmem:[%s1] sm:$0xf]
  %v29 = vld [vmem:[%s1 + $0x4] sm:$0xf]
  %v30 = vld [vmem:[%s1 + $0x8] sm:$0xf]
  %v31 = vld [vmem:[%s1 + $0xc] sm:$0xf]
  %v32 = vld [vmem:[%s1 + $0x10] sm:$0xf]
  %v33 = vld [vmem:[%s1 + $0x14] sm:$0xf]
  %v34 = vld [vmem:[%s1 + $0x18] sm:$0xf]
  %v35 = vld [vmem:[%s1 + $0x1c] sm:$0xf]
  %v36 = vld [vmem:[%s1 + $0x20] sm:$0xf]
  %v37 = vld [vmem:[%s1 + $0x24] sm:$0xf]
  %v38 = vld [vmem:[%s1 + $0x28] sm:$0xf]
  %v39 = vld [vmem:[%s1 + $0x2c] sm:$0xf]
  %v40 = vld [vmem:[%s1 + $0x30] sm:$0xf]
  %v41 = vld [vmem:[%s1 + $0x34] sm:$0xf]
  %v42 = vld [vmem:[%s1 + $0x38] sm:$0xf]
  %v43 = vld [vmem:[%s1 + $0x3c] sm:$0xf]
  %v46 = vunpack.c.l.b16 %v26
  %v47 = vunpack.c.l.b16 %v27
  %v48 = vpack.c.b16 %v47, %v46
  %v66 = vunpack.c.l.b16 %v28
  %v67 = vunpack.c.l.b16 %v29
  %v68 = vunpack.c.l.b16 %v30
  %v69 = vunpack.c.l.b16 %v31
  %v70 = vunpack.c.l.b16 %v32
  %v71 = vunpack.c.l.b16 %v33
  %v72 = vunpack.c.l.b16 %v34
  %v73 = vunpack.c.l.b16 %v35
  %v74 = vunpack.c.l.b16 %v36
  %v75 = vunpack.c.l.b16 %v37
  %v76 = vunpack.c.l.b16 %v38
  %v77 = vunpack.c.l.b16 %v39
  %v78 = vunpack.c.l.b16 %v40
  %v79 = vunpack.c.l.b16 %v41
  %v80 = vunpack.c.l.b16 %v42
  %v81 = vunpack.c.l.b16 %v43
  %v82 = vpack.c.b16 %v67, %v66
  %v83 = vpack.c.b16 %v69, %v68
  %v84 = vpack.c.b16 %v71, %v70
  %v85 = vpack.c.b16 %v73, %v72
  %v86 = vpack.c.b16 %v75, %v74
  %v87 = vpack.c.b16 %v77, %v76
  %v88 = vpack.c.b16 %v79, %v78
  %v89 = vpack.c.b16 %v81, %v80
  %98 = vmatprep.subr.bf16.mxu0 0
  %99 = vmatpush1.bf16.msra.mxu0 %v82
  %100 = vmatprep.subr.bf16.mxu0 0
  %101 = vmatpush1.bf16.msra.mxu0 %v83
  %102 = vmatprep.subr.bf16.mxu0 0
  %103 = vmatpush1.bf16.msra.mxu0 %v84
  %104 = vmatprep.subr.bf16.mxu0 0
  %105 = vmatpush1.bf16.msra.mxu0 %v85
  %106 = vmatprep.subr.bf16.mxu0 0
  %107 = vmatpush1.bf16.msra.mxu0 %v86
  %108 = vmatprep.subr.bf16.mxu0 0
  %109 = vmatpush1.bf16.msra.mxu0 %v87
  %110 = vmatprep.subr.bf16.mxu0 0
  %111 = vmatpush1.bf16.msra.mxu0 %v88
  %112 = vmatprep.subr.bf16.mxu0 0
  %113 = vmatpush1.bf16.msra.mxu0 %v89
  %114 = vmatprep.subr.bf16.mxu0 0
  %115 = vmatpush1.bf16.msra.mxu0 0
  %116 = vmatprep.subr.bf16.mxu0 0
  %117 = vmatpush1.bf16.msra.mxu0 0
  %118 = vmatprep.subr.bf16.mxu0 0
  %119 = vmatpush1.bf16.msra.mxu0 0
  %120 = vmatprep.subr.bf16.mxu0 0
  %121 = vmatpush1.bf16.msra.mxu0 0
  %122 = vmatprep.subr.bf16.mxu0 0
  %123 = vmatpush1.bf16.msra.mxu0 0
  %124 = vmatprep.subr.bf16.mxu0 0
  %125 = vmatpush1.bf16.msra.mxu0 0
  %126 = vmatprep.subr.bf16.mxu0 0
  %127 = vmatpush1.bf16.msra.mxu0 0
  %128 = vmatprep.subr.bf16.mxu0 0
  %129 = vmatpush1.bf16.msra.mxu0 0
  %130 = vmatprep.mubr.bf16.mxu0 0
  %131 = vmatmul.mubr.bf16.gmra.mrb[0].mxu0 %v48
  %v132 = vpop.f32.mrb[0].mxu0
  %v133 = vadd.f32 0.0, %v132
  %v134 = vpop.f32.mrb[0].mxu0
  %v135 = vpop.f32.mrb[0].mxu0
  %v136 = vadd.f32 0.0, %v135
  %v137 = vpop.f32.mrb[0].mxu0
  %138 = vdwg.mxu0
  %v139 = vadd.f32 %v24, %v133
  %v140 = vadd.f32 %v25, %v136
  %141 = vst [vmem:[#allocation2] sm:$0xff] %v139
  %142 = vst [vmem:[#allocation2 + $0x8] sm:$0xff] %v140
  // Predicated region
  $region18: #{qlinear_forward.6} parent=0 // pred_check
    %p143 = pneg %p18
  $region19: #{qlinear_forward.6} parent=0 // pred_check_branch
    %145 = sbr.rel (%p143) target = $region21
  $region20: #{qlinear_forward.6} parent=0 // pred_region
    %v146 = vld [vmem:[#allocation2] sm:$0xff]
    %v147 = vld [vmem:[#allocation2 + $0x8] sm:$0xff]
    %v148 = vld [vmem:[%s2] sm:$0x1]
    %v150 = vlaneseq
    %v151 = vshrl.u32 %v150, 7
    %v152 = vsub.s32 0, %v151
    %v153 = vrot.slane %v148, %v152
    %v155 = vadd.f32 %v146, %v153
    %v156 = vadd.f32 %v147, %v153
    %157 = vst [vmem:[%s3] sm:$0xff] %v155
    %158 = vst [vmem:[%s3 + $0x8] sm:$0xff] %v156
    %v159 = vmin.f32 %v155, %v156
    %v160 = vrot.slane %v159, 4
    %v161 = vmin.f32 %v159, %v160
    %v162 = vrot.slane %v161, 2
    %v163 = vmin.f32 %v161, %v162
    %v164 = vrot.slane %v163, 1
    %v165 = vmin.f32 %v163, %v164
    %v166 = vmax.f32 %v155, %v156
    %v167 = vrot.slane %v166, 4
    %v168 = vmax.f32 %v166, %v167
    %v169 = vrot.slane %v168, 2
    %v170 = vmax.f32 %v168, %v169
    %v171 = vrot.slane %v170, 1
    %v172 = vmax.f32 %v170, %v171
    %173 = vmin.xlane.f32.xlu0 %v165
    %v174 = vpop.xlane.xlu0 %173
    %s175 = vtos %v174
    %v176 = vstv %s175
    %v177 = vadd.f32 %v176, 0.0
    %178 = vst [vmem:[%s4] sm:$0xff] %v177
    %179 = vmax.xlane.f32.xlu0 %v172
    %v180 = vpop.xlane.xlu0 %179
    %s181 = vtos %v180
    %v182 = vstv %s181
    %v183 = vadd.f32 %v182, 0.0
    %184 = vst [vmem:[%s5] sm:$0xff] %v183
  $region21: #{qlinear_forward.6} parent=0 // pred_fallthru
    _
  // Predicated region
  $region22: #{qlinear_forward.6} parent=0 // pred_check
    _
  $region23: #{qlinear_forward.6} parent=0 // pred_check_branch
    %186 = sbr.rel (0) target = $region25
  $region24: #{qlinear_forward.6} parent=0 // pred_region
    _
  $region25: #{qlinear_forward.6} parent=0 // pred_fallthru
    _
  // Predicated region
  $region26: #{qlinear_forward.6} parent=0 // pred_check
    _
  $region27: #{qlinear_forward.6} parent=0 // pred_check_branch
    %188 = sbr.rel (0) target = $region29
  $region28: #{qlinear_forward.6} parent=0 // pred_region
    _
  $region29: #{qlinear_forward.6} parent=0 // pred_fallthru
    _
  // Predicated region
  $region30: #{qlinear_forward.6} parent=0 // pred_check
    _
  $region31: #{qlinear_forward.6} parent=0 // pred_check_branch
    %190 = sbr.rel (0) target = $region33
  $region32: #{qlinear_forward.6} parent=0 // pred_region
    _
  $region33: #{qlinear_forward.6} parent=0 // pred_fallthru
    _
  // Predicated region
  $region34: #{qlinear_forward.6} parent=0 // pred_check
    _
  $region35: #{qlinear_forward.6} parent=0 // pred_check_branch
    %192 = sbr.rel (0) target = $region37
  $region36: #{qlinear_forward.6} parent=0 // pred_region
    _
  $region37: #{qlinear_forward.6} parent=0 // pred_fallthru
    _
  // Predicated region
  $region38: #{qlinear_forward.6} parent=0 // pred_check
    _
  $region39: #{qlinear_forward.6} parent=0 // pred_check_branch
    %194 = sbr.rel (0) target = $region41
  $region40: #{qlinear_forward.6} parent=0 // pred_region
    _
  $region41: #{qlinear_forward.6} parent=0 // pred_fallthru
    _
  // Predicated region
  $region42: #{qlinear_forward.6} parent=0 // pred_check
    _
  $region43: #{qlinear_forward.6} parent=0 // pred_check_branch
    %196 = sbr.rel (0) target = $region45
  $region44: #{qlinear_forward.6} parent=0 // pred_region
    _
  $region45: #{qlinear_forward.6} parent=0 // pred_fallthru
    _

</llo_original>
